<compile_context>
chip_gen: v7x
topology: tpu7x:2x2x1
jax: 0.10.0
libtpu: 0.0.40
codegen_flags: <defaults>
</compile_context>

<pallas_src>
import functools

import jax
import jax.numpy as jnp
from jax import lax
from jax.experimental import pallas as pl
from jax.experimental.pallas import tpu as pltpu


def _round_up(x, m):
    return ((x + m - 1) // m) * m


def _cdiv(a, b):
    return (a + b - 1) // b


# ----------------------------- Pallas kernel ------------------------------

def _mlp_kernel(x_ref, w1_ref, b1_ref, w2_ref, b2_ref, o_ref, *, chunk, bf16_ew):
    # Shapes (leading batch dim squeezed away by pl.Squeezed()):
    #   x_ref : (C_in,  tile_s)   f32 or bf16  (spatial on lanes)
    #   w1_ref: (hidden, C_in)    bf16
    #   b1_ref: (hidden, 1)       f32
    #   w2_ref: (C_out, hidden)   bf16
    #   b2_ref: (C_out, 1)        f32
    #   o_ref : (C_out, tile_s)   f32  (lane-dense stores)
    tile_s = x_ref.shape[-1]
    n_chunks = tile_s // chunk           # static: tile_s is a multiple of chunk

    w1 = w1_ref[...]
    w2 = w2_ref[...]
    b1 = b1_ref[...].astype(jnp.bfloat16) if bf16_ew else b1_ref[...]
    b2 = b2_ref[...]

    def body(i, carry):
        start = pl.multiple_of(i * chunk, 128)
        x = x_ref[:, pl.ds(start, chunk)].astype(jnp.bfloat16)   # MXU operands
        h = jnp.dot(w1, x, preferred_element_type=jnp.float32)
        if bf16_ew:
            # bf16 VPU (v6e/v7x): single pass over the hidden tile.
            h = jnp.maximum(h.astype(jnp.bfloat16) + b1, 0)
        else:
            # f32 elementwise (v5e-safe), then round to bf16 for the 2nd dot.
            h = jnp.maximum(h + b1, 0.0).astype(jnp.bfloat16)
        y = jnp.dot(w2, h, preferred_element_type=jnp.float32)
        o_ref[:, pl.ds(start, chunk)] = (y + b2).astype(o_ref.dtype)
        return carry

    lax.fori_loop(0, n_chunks, body, 0, unroll=True)


@functools.partial(jax.jit, static_argnames=("tile_s", "chunk", "bf16_ew"))
def _mlp_pallas(x3d, w1t, b1, w2t, b2, *, tile_s, chunk, bf16_ew):
    nb, c_in, s = x3d.shape
    hidden = w1t.shape[0]
    c_out = w2t.shape[0]
    grid = (nb, _cdiv(s, tile_s))

    flops = 2 * nb * s * (c_in * hidden + hidden * c_out)
    bytes_accessed = (
        x3d.size * x3d.dtype.itemsize      # activations in
        + nb * c_out * s * 4               # activations out (f32)
        + w1t.size * 2 + w2t.size * 2      # bf16 weights
        + b1.size * 4 + b2.size * 4        # f32 biases
    )

    kernel = functools.partial(_mlp_kernel, chunk=chunk, bf16_ew=bf16_ew)

    return pl.pallas_call(
        kernel,
        out_shape=jax.ShapeDtypeStruct((nb, c_out, s), jnp.float32),
        grid_spec=pltpu.PrefetchScalarGridSpec(
            num_scalar_prefetch=0,
            grid=grid,
            in_specs=[
                pl.BlockSpec((pl.Squeezed(), c_in, tile_s),
                             lambda n, t: (n, 0, t)),
                pl.BlockSpec((hidden, c_in), lambda n, t: (0, 0)),
                pl.BlockSpec((hidden, 1), lambda n, t: (0, 0)),
                pl.BlockSpec((c_out, hidden), lambda n, t: (0, 0)),
                pl.BlockSpec((c_out, 1), lambda n, t: (0, 0)),
            ],
            out_specs=pl.BlockSpec((pl.Squeezed(), c_out, tile_s),
                                   lambda n, t: (n, 0, t)),
        ),
        compiler_params=pltpu.CompilerParams(
            dimension_semantics=("parallel", "parallel"),
            # Explicit budget; fits comfortably under v7x's 64 MiB physical.
            vmem_limit_bytes=32 * 1024 * 1024,
        ),
        cost_estimate=pl.CostEstimate(
            flops=flops, transcendentals=0, bytes_accessed=bytes_accessed),
    )(x3d, w1t, b1, w2t, b2)


# --------------------------- wrapper (glue code) ---------------------------

def _cast_dict_to_half(data):
    # JAX analog of cast_dict_to_half (float32 -> half). On TPU the half
    # type is bfloat16 (PyTorch uses float16 on GPU).
    out = {}
    for k, v in data.items():
        if isinstance(v, jnp.ndarray) and v.dtype == jnp.float32:
            out[k] = v.astype(jnp.bfloat16)
        else:
            out[k] = v
    return out


def _default_bf16_elementwise():
    # bf16 VPU exists on v6e/v7x; older gens (v2-v5) keep f32 elementwise.
    # Either choice is numerically fine; this only picks the faster path.
    try:
        kind = jax.devices()[0].device_kind.lower()
    except Exception:
        return True
    return not any(tag in kind for tag in ("v2", "v3", "v4", "v5"))


class MultiGPUWrapperPallas:
    """Sequential-TPU stand-in for MultiGPUWrapper.

    The inner model is a synthetic 2-layer pointwise MLP (two 1x1 convs with
    ReLU) with deterministically initialized weights.  The per-device fan-out
    via multiprocessing queues is replaced by one Pallas launch per data dict.
    """

    def __init__(self, c_in, hidden, c_out, num_devices=1, fp16=False,
                 tile_s=32768, chunk=2048, seed=0):
        self.world_size = num_devices
        self.fp16 = fp16
        # chunk = in-kernel compute width (lanes); tile_s = per-step DMA width.
        self.chunk = max(128, _round_up(chunk, 128))
        self.tile_s = max(self.chunk, _round_up(tile_s, 128))
        self.bf16_ew = _default_bf16_elementwise()
        k1, k2, k3, k4 = jax.random.split(jax.random.PRNGKey(seed), 4)
        # Channel-major weights, stored bf16 for the MXU (autocast semantics).
        self.w1t = (jax.random.normal(k1, (hidden, c_in), jnp.float32)
                    * (1.0 / jnp.sqrt(c_in))).astype(jnp.bfloat16)
        self.b1 = jax.random.normal(k2, (hidden, 1), jnp.float32) * 0.01
        self.w2t = (jax.random.normal(k3, (c_out, hidden), jnp.float32)
                    * (1.0 / jnp.sqrt(hidden))).astype(jnp.bfloat16)
        self.b2 = jax.random.normal(k4, (c_out, 1), jnp.float32) * 0.01

    def _choose_tiles(self, nb, s):
        tile = min(self.tile_s, _round_up(s, 128))
        # Keep >= ~4 grid steps so both v7x TensorCores stay busy even for a
        # single large image; never shrink below one compute chunk.
        while nb * _cdiv(s, tile) < 4 and tile >= 2 * self.chunk:
            tile = _round_up(tile // 2, 128)
        chunk = min(self.chunk, tile)
        tile = _round_up(tile, chunk)       # kernel loop needs tile % chunk == 0
        return tile, chunk

    def _run_one(self, x_nchw):
        # NCHW -> (N*B, C, H*W): no transpose; channels on sublanes, spatial
        # on the 128-lane axis.
        nb, c, h, w = x_nchw.shape
        s = h * w
        x3d = x_nchw.reshape(nb, c, s)
        tile_s, chunk = self._choose_tiles(nb, s)
        y3d = _mlp_pallas(x3d, self.w1t, self.b1, self.w2t, self.b2,
                          tile_s=tile_s, chunk=chunk, bf16_ew=self.bf16_ew)
        return y3d.reshape(nb, -1, h, w)    # already NCHW, f32

    def forward(self, data_list):
        if self.fp16:
            data_list = [_cast_dict_to_half(d) for d in data_list]
        # One launch per data dict: avoids the full extra HBM pass a
        # jnp.concatenate would cost in front of a memory-bound kernel.
        return [self._run_one(d["x"]) for d in data_list]

    __call__ = forward


# --------------------------------- main ------------------------------------

if __name__ == "__main__":
    B, C_IN, H, W = 2, 4, 16, 16
    HIDDEN, C_OUT = 32, 4

    key = jax.random.PRNGKey(0)
    k_a, k_b = jax.random.split(key)
    data_list = [
        {"x": jax.random.normal(k_a, (B, C_IN, H, W), jnp.float32)},
        {"x": jax.random.normal(k_b, (B, C_IN, H, W), jnp.float32)},
    ]

    wrapper = MultiGPUWrapperPallas(C_IN, HIDDEN, C_OUT, num_devices=2,
                                    fp16=False)
    outputs = wrapper(data_list)
    for o in outputs:
        jax.block_until_ready(o)

    # Reference check: same math and same bf16 rounding points as the kernel.
    w1_f32 = wrapper.w1t.astype(jnp.float32)
    w2_f32 = wrapper.w2t.astype(jnp.float32)

    def ref(x_nchw, bf16_ew):
        b, c, h, w = x_nchw.shape
        x = x_nchw.astype(jnp.bfloat16).astype(jnp.float32).reshape(b, c, h * w)
        hid = jnp.einsum("hc,bcs->bhs", w1_f32, x)
        if bf16_ew:
            hid = jnp.maximum(hid.astype(jnp.bfloat16)
                              + wrapper.b1.astype(jnp.bfloat16)[None], 0)
            hid = hid.astype(jnp.float32)
        else:
            hid = jnp.maximum(hid + wrapper.b1[None], 0.0)
            hid = hid.astype(jnp.bfloat16).astype(jnp.float32)
        y = jnp.einsum("oh,bhs->bos", w2_f32, hid) + wrapper.b2[None]
        return y.reshape(b, -1, h, w)

    ok = True
    for data, out in zip(data_list, outputs):
        r = ref(data["x"], wrapper.bf16_ew)
        ok &= bool(jnp.allclose(out, r, atol=1e-2, rtol=1e-2))
        ok &= out.shape == (B, C_OUT, H, W)
        ok &= out.dtype == jnp.float32

    if ok:
        print("KERNEL_OK")
    else:
        print("MISMATCH")
</pallas_src>

<mosaic_0001>
module attributes {stable_mosaic.version = 11 : i64} {
  func.func @_mlp_kernel(%arg0: i32, %arg1: i32, %arg2: memref<1x4x256xf32, #tpu.memory_space<vmem>>, %arg3: memref<32x4xbf16, #tpu.memory_space<vmem>>, %arg4: memref<32x1xf32, #tpu.memory_space<vmem>>, %arg5: memref<4x32xbf16, #tpu.memory_space<vmem>>, %arg6: memref<4x1xf32, #tpu.memory_space<vmem>>, %arg7: memref<1x4x256xf32, #tpu.memory_space<vmem>>) attributes {dimension_semantics = [#tpu.dimension_semantics<parallel>, #tpu.dimension_semantics<parallel>], iteration_bounds = array<i64: 2, 1>, scalar_prefetch = 0 : i64, scratch_operands = 0 : i64, tpu.core_type = #tpu.core_type<tc>, window_params = [{transform_indices = @transform_0, window_bounds = array<i64: 1, 4, 256>}, {pipeline_mode = #tpu.pipeline_mode<synchronous>, transform_indices = @transform_1, window_bounds = array<i64: 32, 4>}, {pipeline_mode = #tpu.pipeline_mode<synchronous>, transform_indices = @transform_2, window_bounds = array<i64: 32, 1>}, {pipeline_mode = #tpu.pipeline_mode<synchronous>, transform_indices = @transform_3, window_bounds = array<i64: 4, 32>}, {pipeline_mode = #tpu.pipeline_mode<synchronous>, transform_indices = @transform_4, window_bounds = array<i64: 4, 1>}, {transform_indices = @transform_5, window_bounds = array<i64: 1, 4, 256>}]} {
    %c0 = arith.constant 0 : index
    %c0_0 = arith.constant 0 : index
    %0 = vector.load %arg3[%c0, %c0_0] : memref<32x4xbf16, #tpu.memory_space<vmem>>, vector<32x4xbf16>
    %c0_1 = arith.constant 0 : index
    %c0_2 = arith.constant 0 : index
    %1 = vector.load %arg5[%c0_1, %c0_2] : memref<4x32xbf16, #tpu.memory_space<vmem>>, vector<4x32xbf16>
    %c0_3 = arith.constant 0 : index
    %c0_4 = arith.constant 0 : index
    %2 = vector.load %arg4[%c0_3, %c0_4] : memref<32x1xf32, #tpu.memory_space<vmem>>, vector<32x1xf32>
    %3 = arith.truncf %2 : vector<32x1xf32> to vector<32x1xbf16>
    %c0_5 = arith.constant 0 : index
    %c0_6 = arith.constant 0 : index
    %4 = vector.load %arg6[%c0_5, %c0_6] : memref<4x1xf32, #tpu.memory_space<vmem>>, vector<4x1xf32>
    %c0_i32 = arith.constant 0 : i32
    %c256_i32 = arith.constant 256 : i32
    %5 = arith.muli %c0_i32, %c256_i32 : i32
    %6 = tpu.assume_multiple %5, 128 : i32
    %c0_7 = arith.constant 0 : index
    %c0_8 = arith.constant 0 : index
    %7 = arith.index_cast %6 : i32 to index
    %8 = vector.load %arg2[%c0_7, %c0_8, %7] : memref<1x4x256xf32, #tpu.memory_space<vmem>>, vector<1x4x256xf32>
    %9 = vector.shape_cast %8 : vector<1x4x256xf32> to vector<4x256xf32>
    %10 = arith.truncf %9 : vector<4x256xf32> to vector<4x256xbf16>
    %cst = arith.constant dense<0.000000e+00> : vector<32x256xf32>
    %11 = tpu.matmul %0, %10, %cst {dimension_numbers = #tpu.dot_dimension_numbers<[1], [0], [0], [1], [0, 0, 1, 1], [], []>} : vector<32x4xbf16>, vector<4x256xbf16>, vector<32x256xf32> -> vector<32x256xf32>
    %12 = arith.truncf %11 : vector<32x256xf32> to vector<32x256xbf16>
    %13 = vector.broadcast %3 : vector<32x1xbf16> to vector<32x256xbf16>
    %14 = arith.addf %12, %13 : vector<32x256xbf16>
    %cst_9 = arith.constant 0.000000e+00 : bf16
    %15 = vector.broadcast %cst_9 : bf16 to vector<32x256xbf16>
    %16 = arith.maximumf %14, %15 : vector<32x256xbf16>
    %cst_10 = arith.constant dense<0.000000e+00> : vector<4x256xf32>
    %17 = tpu.matmul %1, %16, %cst_10 {dimension_numbers = #tpu.dot_dimension_numbers<[1], [0], [0], [1], [0, 0, 1, 1], [], []>} : vector<4x32xbf16>, vector<32x256xbf16>, vector<4x256xf32> -> vector<4x256xf32>
    %18 = vector.broadcast %4 : vector<4x1xf32> to vector<4x256xf32>
    %19 = arith.addf %17, %18 : vector<4x256xf32>
    %c0_11 = arith.constant 0 : index
    %c0_12 = arith.constant 0 : index
    %20 = arith.index_cast %6 : i32 to index
    %21 = vector.load %arg7[%c0_11, %c0_12, %20] : memref<1x4x256xf32, #tpu.memory_space<vmem>>, vector<1x4x256xf32>
    %22 = vector.shape_cast %21 : vector<1x4x256xf32> to vector<4x256xf32>
    %23 = vector.shape_cast %19 : vector<4x256xf32> to vector<1x4x256xf32>
    tpu.vector_store %arg7[%c0_11, %c0_12, %20], %23 {strides = array<i32>} : memref<1x4x256xf32, #tpu.memory_space<vmem>>, vector<1x4x256xf32>,
    %c1_i32 = arith.constant 1 : i32
    return
  }
  func.func @transform_0(%arg0: i32, %arg1: i32) -> (i32, i32, i32) {
    %c0_i32 = arith.constant 0 : i32
    %c0_i32_0 = arith.constant 0 : i32
    return %arg0, %c0_i32, %arg1 : i32, i32, i32
  }
  func.func @transform_1(%arg0: i32, %arg1: i32) -> (i32, i32) {
    %c0_i32 = arith.constant 0 : i32
    %c0_i32_0 = arith.constant 0 : i32
    %c0_i32_1 = arith.constant 0 : i32
    return %c0_i32, %c0_i32_0 : i32, i32
  }
  func.func @transform_2(%arg0: i32, %arg1: i32) -> (i32, i32) {
    %c0_i32 = arith.constant 0 : i32
    %c0_i32_0 = arith.constant 0 : i32
    %c0_i32_1 = arith.constant 0 : i32
    return %c0_i32, %c0_i32_0 : i32, i32
  }
  func.func @transform_3(%arg0: i32, %arg1: i32) -> (i32, i32) {
    %c0_i32 = arith.constant 0 : i32
    %c0_i32_0 = arith.constant 0 : i32
    %c0_i32_1 = arith.constant 0 : i32
    return %c0_i32, %c0_i32_0 : i32, i32
  }
  func.func @transform_4(%arg0: i32, %arg1: i32) -> (i32, i32) {
    %c0_i32 = arith.constant 0 : i32
    %c0_i32_0 = arith.constant 0 : i32
    %c0_i32_1 = arith.constant 0 : i32
    return %c0_i32, %c0_i32_0 : i32, i32
  }
  func.func @transform_5(%arg0: i32, %arg1: i32) -> (i32, i32, i32) {
    %c0_i32 = arith.constant 0 : i32
    %c0_i32_0 = arith.constant 0 : i32
    return %arg0, %c0_i32, %arg1 : i32, i32, i32
  }
}

</mosaic_0001>

<llo_original>
// kernel: _mlp_pallas.1
$region0: #{_mlp_pallas.1}
  #allocation0 [shape = 'u32[]', space=smem, size = 0x4, offset = 0x4, fixed_abs, tag = 'smem constant byte address 0x4 - core index']
  #allocation1 [shape = 'u32[144,128]{1,0:T(1,128)}', space=vmem, size = 0x12000, scoped, tag = 'internal scratch']
  %s0 = inlined_call_operand.vmem [shape: f32[2,4,256], index: 0, kind: input, shape index: {}]
  %s1 = inlined_call_operand.vmem [shape: bf16[32,4], index: 1, kind: input, shape index: {}]
  %s2 = inlined_call_operand.vmem [shape: f32[32,1], index: 2, kind: input, shape index: {}]
  %s3 = inlined_call_operand.vmem [shape: bf16[4,32], index: 3, kind: input, shape index: {}]
  %s4 = inlined_call_operand.vmem [shape: f32[4,1], index: 4, kind: input, shape index: {}]
  %s5 = inlined_call_operand.hbm [shape: f32[2,4,256], index: 5, kind: output, shape index: {}]
  %s6 = sld [smem:[#allocation0]]
  $region53: #{_mlp_pallas.1} parent=0
    _
  %s8 = ssub.s32 1, %s6
  %s9 = scalar_select 0, %s8, %s6
  $region1: #{_mlp_pallas.1} parent=0
    #allocation2 [shape = 'u8[8192]{0}', space=vmem, size = 0x2000, scoped, tag = 'output window, operand 0']
    #allocation3 [shape = 's32[2]{0}', space=sflag, size = 0x8, scoped, tag = 'scoped memory for _mlp_pallas.1']
    %10 = vsyncpa [#allocation3], 0
    %s11 = scalar_lea.sflag [#allocation3], 1
    %12 = vsyncpa %s11, 0
    loop: start=0, step=1, limit=4
    $region2: #{_mlp_pallas.1} parent=1 // loop_pre_header
      _
    $region3: #{_mlp_pallas.1} parent=1 // loop_header
      %s14 = sphi 0, %s18
      %p15 = scmp.ge.s32.totalorder %s14, 4
      %s21 = sphi 0, %s33
      %s22 = sphi 0, %s29
      %s23 = sphi 0, %s21
      %s24 = sphi 0, %s22
      %s25 = sphi 0, %s23
      %s26 = sphi 0, %s24
      %s38 = sphi 0, %s40
      %s41 = sphi 0, %s38
      %s42 = sphi 0, %s41
      %s58 = sphi 0, %s42
      %s62 = sphi 0, %s62
      %s64 = sphi 0, %s62
      %s65 = sphi 0, %s64
      %s79 = sphi 0, %s65
      %s83 = sphi 0, %s83
      %s85 = sphi 0, %s83
      %s86 = sphi 0, %s85
      %s100 = sphi 0, %s86
      %s104 = sphi 0, %s104
      %s106 = sphi 0, %s104
      %s107 = sphi 0, %s106
      %s121 = sphi 0, %s107
      %s125 = sphi 0, %s125
      %s127 = sphi 0, %s125
      %s128 = sphi 0, %s127
      %s142 = sphi 0, %s128
      %s150 = sphi 0, %s152
      %s153 = sphi 0, %s150
      %s154 = sphi 0, %s153
      %s170 = sphi 0, %s154
    $region4: #{_mlp_pallas.1} parent=1 // loop_header_branch
      %17 = sbr.rel (%p15) target = $region8
    $region5: #{_mlp_pallas.1} parent=1 // loop_body
      %s19 = ssub.s32 %s14, 1
      %s20 = ssub.s32 %s14, 2
      %s27 = sadd.s32 1, %s22
      %p28 = scmp.ge.s32.totalorder %s27, 1
      %s29 = scalar_select %p28, 0, %s27
      %s30 = sadd.s32 1, %s21
      %s31 = scalar_select %p28, %s30, %s21
      %p32 = scmp.ge.s32.totalorder %s31, 2
      %s33 = scalar_select %p32, 0, %s31
      %s34 = ssub.s32 %s21, %s33
      %s35 = ssub.s32 %s22, %s29
      %s36 = sor.u32 %s34, %s35
      %p37 = scmp.eq.s32.totalorder %s36, 0
      %s39 = sadd.s32 %s38, 1
      %s40 = scalar_select %p37, %s38, %s39
      %p43 = pneg %p37
      %p44 = scmp.eq.s32.totalorder %s14, 1
      %p45 = por %p43, %p44
      %p46 = scmp.ne.s32.totalorder %s38, %s41
      %p47 = scmp.eq.s32.totalorder %s14, 0
      %p48 = por %p46, %p47
      %p49 = scmp.ne.s32.totalorder %s38, %s41
      %p50 = scmp.eq.s32.totalorder %s19, 1
      %p51 = por %p49, %p50
      %p52 = scmp.ne.s32.totalorder %s41, %s42
      %p53 = scmp.eq.s32.totalorder %s19, 0
      %p54 = por %p52, %p53
      %p55 = scmp.ne.s32.totalorder %s41, %s42
      %p56 = scmp.eq.s32.totalorder %s20, 1
      %p57 = por %p55, %p56
      %p59 = scmp.ne.s32.totalorder %s42, %s58
      %p60 = scmp.eq.s32.totalorder %s20, 0
      %p61 = por %p59, %p60
      %s63 = sadd.s32 %s62, 1
      %p66 = scmp.eq.s32.totalorder %s14, 1
      %p67 = scmp.ne.s32.totalorder %s62, %s64
      %p68 = scmp.eq.s32.totalorder %s14, 0
      %p69 = por %p67, %p68
      %p70 = scmp.ne.s32.totalorder %s62, %s64
      %p71 = scmp.eq.s32.totalorder %s19, 1
      %p72 = por %p70, %p71
      %p73 = scmp.ne.s32.totalorder %s64, %s65
      %p74 = scmp.eq.s32.totalorder %s19, 0
      %p75 = por %p73, %p74
      %p76 = scmp.ne.s32.totalorder %s64, %s65
      %p77 = scmp.eq.s32.totalorder %s20, 1
      %p78 = por %p76, %p77
      %p80 = scmp.ne.s32.totalorder %s65, %s79
      %p81 = scmp.eq.s32.totalorder %s20, 0
      %p82 = por %p80, %p81
      %s84 = sadd.s32 %s83, 1
      %p87 = scmp.eq.s32.totalorder %s14, 1
      %p88 = scmp.ne.s32.totalorder %s83, %s85
      %p89 = scmp.eq.s32.totalorder %s14, 0
      %p90 = por %p88, %p89
      %p91 = scmp.ne.s32.totalorder %s83, %s85
      %p92 = scmp.eq.s32.totalorder %s19, 1
      %p93 = por %p91, %p92
      %p94 = scmp.ne.s32.totalorder %s85, %s86
      %p95 = scmp.eq.s32.totalorder %s19, 0
      %p96 = por %p94, %p95
      %p97 = scmp.ne.s32.totalorder %s85, %s86
      %p98 = scmp.eq.s32.totalorder %s20, 1
      %p99 = por %p97, %p98
      %p101 = scmp.ne.s32.totalorder %s86, %s100
      %p102 = scmp.eq.s32.totalorder %s20, 0
      %p103 = por %p101, %p102
      %s105 = sadd.s32 %s104, 1
      %p108 = scmp.eq.s32.totalorder %s14, 1
      %p109 = scmp.ne.s32.totalorder %s104, %s106
      %p110 = scmp.eq.s32.totalorder %s14, 0
      %p111 = por %p109, %p110
      %p112 = scmp.ne.s32.totalorder %s104, %s106
      %p113 = scmp.eq.s32.totalorder %s19, 1
      %p114 = por %p112, %p113
      %p115 = scmp.ne.s32.totalorder %s106, %s107
      %p116 = scmp.eq.s32.totalorder %s19, 0
      %p117 = por %p115, %p116
      %p118 = scmp.ne.s32.totalorder %s106, %s107
      %p119 = scmp.eq.s32.totalorder %s20, 1
      %p120 = por %p118, %p119
      %p122 = scmp.ne.s32.totalorder %s107, %s121
      %p123 = scmp.eq.s32.totalorder %s20, 0
      %p124 = por %p122, %p123
      %s126 = sadd.s32 %s125, 1
      %p129 = scmp.eq.s32.totalorder %s14, 1
      %p130 = scmp.ne.s32.totalorder %s125, %s127
      %p131 = scmp.eq.s32.totalorder %s14, 0
      %p132 = por %p130, %p131
      %p133 = scmp.ne.s32.totalorder %s125, %s127
      %p134 = scmp.eq.s32.totalorder %s19, 1
      %p135 = por %p133, %p134
      %p136 = scmp.ne.s32.totalorder %s127, %s128
      %p137 = scmp.eq.s32.totalorder %s19, 0
      %p138 = por %p136, %p137
      %p139 = scmp.ne.s32.totalorder %s127, %s128
      %p140 = scmp.eq.s32.totalorder %s20, 1
      %p141 = por %p139, %p140
      %p143 = scmp.ne.s32.totalorder %s128, %s142
      %p144 = scmp.eq.s32.totalorder %s20, 0
      %p145 = por %p143, %p144
      %s146 = ssub.s32 %s21, %s33
      %s147 = ssub.s32 %s22, %s29
      %s148 = sor.u32 %s146, %s147
      %p149 = scmp.eq.s32.totalorder %s148, 0
      %s151 = sadd.s32 %s150, 1
      %s152 = scalar_select %p149, %s150, %s151
      %p155 = pneg %p149
      %p156 = scmp.eq.s32.totalorder %s14, 1
      %p157 = por %p155, %p156
      %p158 = scmp.ne.s32.totalorder %s150, %s153
      %p159 = scmp.eq.s32.totalorder %s14, 0
      %p160 = por %p158, %p159
      %p161 = scmp.ne.s32.totalorder %s150, %s153
      %p162 = scmp.eq.s32.totalorder %s19, 1
      %p163 = por %p161, %p162
      %p164 = scmp.ne.s32.totalorder %s153, %s154
      %p165 = scmp.eq.s32.totalorder %s19, 0
      %p166 = por %p164, %p165
      %p167 = scmp.ne.s32.totalorder %s153, %s154
      %p168 = scmp.eq.s32.totalorder %s20, 1
      %p169 = por %p167, %p168
      %p171 = scmp.ne.s32.totalorder %s154, %s170
      %p172 = scmp.eq.s32.totalorder %s20, 0
      %p173 = por %p171, %p172
      %p174 = scmp.le.s32.totalorder 1, %s14
      %p175 = scmp.lt.s32.totalorder %s14, 3
      %p176 = pnand %p174, %p175
      %p177 = pneg %p176
      // Predicated region
      $region9: #{_mlp_pallas.1} parent=5 // pred_check
        _
      $region10: #{_mlp_pallas.1} parent=5 // pred_check_branch
        %179 = sbr.rel (%p176) target = $region12
      $region11: #{_mlp_pallas.1} parent=5 // pred_region
        %s180 = ssub.s32 %s14, 1
        // Predicated region
        $region13: #{_mlp_pallas.1} parent=11 // pred_check
          %p181 = pneg %p75
        $region14: #{_mlp_pallas.1} parent=11 // pred_check_branch
          %183 = sbr.rel (%p181) target = $region16
        $region15: #{_mlp_pallas.1} parent=11 // pred_region
          _
        $region16: #{_mlp_pallas.1} parent=11 // pred_fallthru
          _
        // Predicated region
        $region17: #{_mlp_pallas.1} parent=11 // pred_check
          %p184 = pneg %p96
        $region18: #{_mlp_pallas.1} parent=11 // pred_check_branch
          %186 = sbr.rel (%p184) target = $region20
        $region19: #{_mlp_pallas.1} parent=11 // pred_region
          _
        $region20: #{_mlp_pallas.1} parent=11 // pred_fallthru
          _
        // Predicated region
        $region21: #{_mlp_pallas.1} parent=11 // pred_check
          %p187 = pneg %p117
        $region22: #{_mlp_pallas.1} parent=11 // pred_check_branch
          %189 = sbr.rel (%p187) target = $region24
        $region23: #{_mlp_pallas.1} parent=11 // pred_region
          _
        $region24: #{_mlp_pallas.1} parent=11 // pred_fallthru
          _
        // Predicated region
        $region25: #{_mlp_pallas.1} parent=11 // pred_check
          %p190 = pneg %p138
        $region26: #{_mlp_pallas.1} parent=11 // pred_check_branch
          %192 = sbr.rel (%p190) target = $region28
        $region27: #{_mlp_pallas.1} parent=11 // pred_region
          _
        $region28: #{_mlp_pallas.1} parent=11 // pred_fallthru
          _
      $region12: #{_mlp_pallas.1} parent=5 // pred_fallthru
        _
      %p193 = scmp.lt.s32.totalorder %s14, 2
      // Predicated region
      $region29: #{_mlp_pallas.1} parent=5 // pred_check
        %p194 = pneg %p193
      $region30: #{_mlp_pallas.1} parent=5 // pred_check_branch
        %196 = sbr.rel (%p194) target = $region32
      $region31: #{_mlp_pallas.1} parent=5 // pred_region
        // Predicated region
        $region33: #{_mlp_pallas.1} parent=31 // pred_check
          %p197 = pneg %p48
        $region34: #{_mlp_pallas.1} parent=31 // pred_check_branch
          %199 = sbr.rel (%p197) target = $region36
        $region35: #{_mlp_pallas.1} parent=31 // pred_region
          %s200 = smul.u32 2, %s22
          %p201 = scmp.lt.s32.totalorder %s21, 1
          %s202 = scalar_select %p201, %s21, 1
          %p203 = scmp.lt.s32.totalorder %s200, 1
          %s204 = scalar_select %p203, %s200, 1
          %s205 = smul.addr %s202, 2
          %s206 = sadd.s32 %s204, %s205
          %s207 = smul.addr %s206, 4
          %s208 = scalar_lea.vmem %s0, %s207
          %s209 = smul.u32 2, %s22
        $region36: #{_mlp_pallas.1} parent=31 // pred_fallthru
          _
      $region32: #{_mlp_pallas.1} parent=5 // pred_fallthru
        _
      %p210 = scmp.le.s32.totalorder 1, %s14
      %p211 = scmp.lt.s32.totalorder %s14, 3
      %p212 = pnand %p210, %p211
      %p213 = pneg %p212
      // Predicated region
      $region37: #{_mlp_pallas.1} parent=5 // pred_check
        _
      $region38: #{_mlp_pallas.1} parent=5 // pred_check_branch
        %215 = sbr.rel (%p212) target = $region40
      $region39: #{_mlp_pallas.1} parent=5 // pred_region
        %s216 = ssub.s32 %s14, 1
        %s217 = smul.u32 2, %s24
        %p218 = scmp.lt.s32.totalorder %s23, 1
        %s219 = scalar_select %p218, %s23, 1
        %p220 = scmp.lt.s32.totalorder %s217, 1
        %s221 = scalar_select %p220, %s217, 1
        %s222 = smul.addr %s219, 2
        %s223 = sadd.s32 %s221, %s222
        %s224 = smul.addr %s223, 4
        %s225 = scalar_lea.vmem %s0, %s224
        %p226 = pneg %p54
        %p227 = pneg %p51
        %p228 = pneg %p75
        %p229 = pneg %p72
        %p230 = pneg %p96
        %p231 = pneg %p93
        %p232 = pneg %p117
        %p233 = pneg %p114
        %p234 = pneg %p138
        %p235 = pneg %p135
        %p236 = pneg %p166
        %p237 = pneg %p163
        %s238 = sand.u32 %s153, 1
        %s239 = scalar_lea.sflag [#allocation3], %s238
        %s240 = sand.u32 %s153, 1
        %s241 = smul.addr %s240, 8
        %s242 = scalar_lea.vmem [#allocation2], %s241
        %s243 = smul.u32 2, %s24
        %p244 = scmp.lt.s32.totalorder %s23, 1
        %s245 = scalar_select %p244, %s23, 1
        %p246 = scmp.lt.s32.totalorder %s243, 1
        %s247 = scalar_select %p246, %s243, 1
        %s248 = smul.addr %s245, 2
        %s249 = sadd.s32 %s247, %s248
        %s250 = smul.addr %s249, 4
        %s251 = scalar_lea.vmem %s0, %s250
        %s252 = smul.u32 2, %s24
        %s253 = smul.u32 2, %s24
        %v255 = vld [vmem:[%s1] sm:$0xf]
        %v256 = vld [vmem:[%s1 + $0x4] sm:$0xf]
        %v257 = vld [vmem:[%s1 + $0x8] sm:$0xf]
        %v258 = vld [vmem:[%s1 + $0xc] sm:$0xf]
        %v259 = vld [vmem:[%s3] sm:$0x3]
        %v260 = vld [vmem:[%s2] sm:$0xff]
        %v261 = vld [vmem:[%s2 + $0x8] sm:$0xff]
        %v262 = vld [vmem:[%s2 + $0x10] sm:$0xff]
        %v263 = vld [vmem:[%s2 + $0x18] sm:$0xff]
        %v264 = vpack.c.bf16 %v261, %v260
        %v265 = vpack.c.bf16 %v263, %v262
        %v266 = vld [vmem:[%s4] sm:$0xf]
        %v267 = vld [vmem:[%s251] sm:$0xff]
        %v269 = vcombine.high %v267, %v267
        %v271 = vpack.c.bf16 %v267, %v267
        %v272 = vpack.c.bf16 %v269, %v269
        %v277 = vunpack.c.l.b16 %v255
        %v278 = vunpack.c.l.b16 %v256
        %v279 = vunpack.c.l.b16 %v257
        %v280 = vunpack.c.l.b16 %v258
        %v281 = vpack.c.b16 %v278, %v277
        %v282 = vpack.c.b16 %v280, %v279
        %vm283 = vcmask 31744
        %v285 = vsel %vm283, %v281, 0
        %v288 = vsel %vm283, %v282, 0
        %vm290 = vcmask 1041408
        %v292 = vsel %vm290, %v271, 0
        %v295 = vsel %vm290, %v272, 0
        %297 = vmatprep.subr.bf16.mxu0 %v295
        %298 = vmatpush1.bf16.msra.mxu0 %v292
        %299 = vmatprep.subr.bf16.mxu0 0
        %300 = vmatpush1.bf16.msra.mxu0 0
        %301 = vmatprep.subr.bf16.mxu0 0
        %302 = vmatpush1.bf16.msra.mxu0 0
        %303 = vmatprep.subr.bf16.mxu0 0
        %304 = vmatpush1.bf16.msra.mxu0 0
        %305 = vmatprep.subr.bf16.mxu0 0
        %306 = vmatpush1.bf16.msra.mxu0 0
        %307 = vmatprep.subr.bf16.mxu0 0
        %308 = vmatpush1.bf16.msra.mxu0 0
        %309 = vmatprep.subr.bf16.mxu0 0
        %310 = vmatpush1.bf16.msra.mxu0 0
        %311 = vmatprep.subr.bf16.mxu0 0
        %312 = vmatpush1.bf16.msra.mxu0 0
        %313 = vmatprep.subr.bf16.mxu0 0
        %314 = vmatpush1.bf16.msra.mxu0 0
        %315 = vmatprep.subr.bf16.mxu0 0
        %316 = vmatpush1.bf16.msra.mxu0 0
        %317 = vmatprep.subr.bf16.mxu0 0
        %318 = vmatpush1.bf16.msra.mxu0 0
        %319 = vmatprep.subr.bf16.mxu0 0
        %320 = vmatpush1.bf16.msra.mxu0 0
        %321 = vmatprep.subr.bf16.mxu0 0
        %322 = vmatpush1.bf16.msra.mxu0 0
        %323 = vmatprep.subr.bf16.mxu0 0
        %324 = vmatpush1.bf16.msra.mxu0 0
        %325 = vmatprep.subr.bf16.mxu0 0
        %326 = vmatpush1.bf16.msra.mxu0 0
        %327 = vmatprep.subr.bf16.mxu0 0
        %328 = vmatpush1.bf16.msra.mxu0 0
        %329 = vmatprep.mubr.bf16.mxu0 0
        %330 = vmatmul.mubr.bf16.gmra.mrb[0].mxu0 %v285
        %v331 = vpop.f32.mrb[0].mxu0
        %v332 = vadd.f32 0.0, %v331
        %v333 = vpop.f32.mrb[0].mxu0
        %v334 = vadd.f32 0.0, %v333
        %v335 = vpop.f32.mrb[0].mxu0
        %v336 = vadd.f32 0.0, %v335
        %v337 = vpop.f32.mrb[0].mxu0
        %v338 = vadd.f32 0.0, %v337
        %339 = vmatprep.mubr.bf16.mxu0 0
        %340 = vmatmul.mubr.bf16.gmra.mrb[0].mxu0 %v288
        %v341 = vpop.f32.mrb[0].mxu0
        %v342 = vadd.f32 0.0, %v341
        %v343 = vpop.f32.mrb[0].mxu0
        %v344 = vadd.f32 0.0, %v343
        %v345 = vpop.f32.mrb[0].mxu0
        %v346 = vadd.f32 0.0, %v345
        %v347 = vpop.f32.mrb[0].mxu0
        %v348 = vadd.f32 0.0, %v347
        %349 = vdwg.mxu0
        %v350 = vpack.c.bf16 %v336, %v332
        %v351 = vpack.c.bf16 %v338, %v334
        %v352 = vpack.c.bf16 %v346, %v342
        %v353 = vpack.c.bf16 %v348, %v344
        %355 = vset.pattern.permute.xlu0 0
        %356 = vperm.xlu0 %355, %v264
        %v357 = vpop.permute.xlu0 %356
        %360 = vset.pattern.permute.xlu0 0
        %361 = vperm.xlu0 %360, %v265
        %v362 = vpop.permute.xlu0 %361
        %v364 = vadd.bf16 %v350, %v357
        %v365 = vadd.bf16 %v351, %v357
        %v366 = vadd.bf16 %v352, %v362
        %v367 = vadd.bf16 %v353, %v362
        %v368 = vmax.bf16 %v364, 0
        %v369 = vmax.bf16 %v365, 0
        %v370 = vmax.bf16 %v366, 0
        %v371 = vmax.bf16 %v367, 0
        %373 = vset.pattern.permute.xlu0 0
        %374 = vperm.xlu0 %373, %v266
        %v375 = vpop.permute.xlu0 %374
        %vm377 = vcmask 261120
        %v379 = vsel %vm377, %v259, 0
        %381 = vmatprep.subr.bf16.mxu0 %v369
        %382 = vmatpush1.bf16.msra.mxu0 %v368
        %383 = vmatprep.subr.bf16.mxu0 %v371
        %384 = vmatpush1.bf16.msra.mxu0 %v370
        %385 = vmatprep.subr.bf16.mxu0 0
        %386 = vmatpush1.bf16.msra.mxu0 0
        %387 = vmatprep.subr.bf16.mxu0 0
        %388 = vmatpush1.bf16.msra.mxu0 0
        %389 = vmatprep.subr.bf16.mxu0 0
        %390 = vmatpush1.bf16.msra.mxu0 0
        %391 = vmatprep.subr.bf16.mxu0 0
        %392 = vmatpush1.bf16.msra.mxu0 0
        %393 = vmatprep.subr.bf16.mxu0 0
        %394 = vmatpush1.bf16.msra.mxu0 0
        %395 = vmatprep.subr.bf16.mxu0 0
        %396 = vmatpush1.bf16.msra.mxu0 0
        %397 = vmatprep.subr.bf16.mxu0 0
        %398 = vmatpush1.bf16.msra.mxu0 0
        %399 = vmatprep.subr.bf16.mxu0 0
        %400 = vmatpush1.bf16.msra.mxu0 0
        %401 = vmatprep.subr.bf16.mxu0 0
        %402 = vmatpush1.bf16.msra.mxu0 0
        %403 = vmatprep.subr.bf16.mxu0 0
        %404 = vmatpush1.bf16.msra.mxu0 0
        %405 = vmatprep.subr.bf16.mxu0 0
        %406 = vmatpush1.bf16.msra.mxu0 0
        %407 = vmatprep.subr.bf16.mxu0 0
        %408 = vmatpush1.bf16.msra.mxu0 0
        %409 = vmatprep.subr.bf16.mxu0 0
        %410 = vmatpush1.bf16.msra.mxu0 0
        %411 = vmatprep.subr.bf16.mxu0 0
        %412 = vmatpush1.bf16.msra.mxu0 0
        %413 = vmatprep.mubr.bf16.mxu0 0
        %414 = vmatmul.mubr.bf16.gmra.mrb[0].mxu0 %v379
        %v415 = vpop.f32.mrb[0].mxu0
        %v416 = vadd.f32 %v375, %v415
        %v417 = vpop.f32.mrb[0].mxu0
        %v418 = vadd.f32 %v375, %v417
        %v419 = vpop.f32.mrb[0].mxu0
        %v420 = vpop.f32.mrb[0].mxu0
        %421 = vdwg.mxu0
        %v424 = vcombine.low %v416, %v418
        %426 = vst [vmem:[%s242] sm:$0xff] %v424
        %s427 = sand.u32 %s153, 1
        %s428 = scalar_lea.sflag [#allocation3], %s427
        %s429 = sand.u32 %s153, 1
        %s430 = smul.addr %s429, 8
        %s431 = scalar_lea.vmem [#allocation2], %s430
        // Predicated region
        $region41: #{_mlp_pallas.1} parent=39 // pred_check
          %p432 = pneg %p163
        $region42: #{_mlp_pallas.1} parent=39 // pred_check_branch
          %434 = sbr.rel (%p432) target = $region44
        $region43: #{_mlp_pallas.1} parent=39 // pred_region
          %s435 = smul.u32 2, %s24
          %s437 = ssub.s32 128, 128
          %438 = vsyncadd %s428, %s437
          %s439 = smul.addr %s23, 2
          %s440 = sadd.s32 %s435, %s439
          %s441 = smul.addr %s440, 64
          %s442 = scalar_lea.hbm %s5, %s441
          %s444 = sshll.u32 %s431, 4
          %s445 = int_to_ptr.vmem [resolvable:$true] %s444
          %447 = dma.vmem_to_hbm [thread:$0]  %s445, 128, %s442, %s428
        $region44: #{_mlp_pallas.1} parent=39 // pred_fallthru
          _
      $region40: #{_mlp_pallas.1} parent=5 // pred_fallthru
        _
      %p448 = scmp.le.s32.totalorder 2, %s14
      // Predicated region
      $region45: #{_mlp_pallas.1} parent=5 // pred_check
        %p449 = pneg %p448
      $region46: #{_mlp_pallas.1} parent=5 // pred_check_branch
        %451 = sbr.rel (%p449) target = $region48
      $region47: #{_mlp_pallas.1} parent=5 // pred_region
        %s452 = ssub.s32 %s14, 2
        // Predicated region
        $region49: #{_mlp_pallas.1} parent=47 // pred_check
          %p453 = pneg %p169
        $region50: #{_mlp_pallas.1} parent=47 // pred_check_branch
          %455 = sbr.rel (%p453) target = $region52
        $region51: #{_mlp_pallas.1} parent=47 // pred_region
          %s456 = sand.u32 %s154, 1
          %s457 = scalar_lea.sflag [#allocation3], %s456
          %s458 = sand.u32 %s154, 1
          %s459 = smul.addr %s458, 8
          %s460 = scalar_lea.vmem [#allocation2], %s459
          %461 = dma.done %s457, 128
        $region52: #{_mlp_pallas.1} parent=47 // pred_fallthru
          _
      $region48: #{_mlp_pallas.1} parent=5 // pred_fallthru
        _
    $region6: #{_mlp_pallas.1} parent=1 // loop_footer
      %s18 = sadd.s32 1, %s14
    $region7: #{_mlp_pallas.1} parent=1 // loop_footer_branch
      %13 = sbr.rel target = $region3
    $region8: #{_mlp_pallas.1} parent=1 // loop_exit
      _
    %462 = vsyncpa [#allocation3], 1
    %s463 = scalar_lea.sflag [#allocation3], 1
    %464 = vsyncpa %s463, 1

</llo_original>
